<compile_context>
chip_gen: v6e
topology: v6e:2x2x1
jax: 0.10.0
libtpu: 0.0.40
codegen_flags: <defaults>
</compile_context>

<pallas_src>
import functools

import jax
import jax.numpy as jnp
from jax.experimental import pallas as pl
from jax.experimental.pallas import tpu as pltpu

HIDDEN = 64
OUT_LANES = 128  # lane-dense output slab width (>= action_dim + 1)


def _round_up(x, m):
    return ((x + m - 1) // m) * m


def _choose_tm(batch, tm_request):
    """Pick the batch tile: multiple of 16, capped to the batch, and split into
    >= 2 grid steps for larger batches so dual-TensorCore chips (v7x) can shard
    the "parallel" batch axis across both cores."""
    tm = min(tm_request, _round_up(batch, 16))
    tm = max(16, _round_up(tm, 16))
    if batch >= 256 and _round_up(batch, tm) // tm < 2:
        tm = max(16, _round_up((batch + 1) // 2, 16))
    return tm


def actor_critic_kernel(state_ref, w1_ref, b1_ref, wh_ref, bh_ref, out_ref, *,
                        action_dim):
    # fc: Linear(state_dim, 64) + ReLU.  In-kernel bf16 cast of the f32 state
    # (VPU, hidden under the DMA); f32 MXU accumulation.
    x = state_ref[...].astype(jnp.bfloat16)                          # [TM, S]
    h = jnp.dot(x, w1_ref[...], preferred_element_type=jnp.float32)  # [TM, 64] f32
    h = jnp.maximum(h + b1_ref[...], 0.0)

    # Fused heads: one lane-dense matmul -> [policy logits | value | zero pad].
    hw = jnp.dot(h.astype(jnp.bfloat16), wh_ref[...],
                 preferred_element_type=jnp.float32) + bh_ref[...]   # [TM, 128] f32

    # Softmax over the policy lanes only (masked -inf elsewhere, so exp -> 0).
    # NOTE(v7x): if XLU becomes the binding slot, the row-sum below can be done
    # on the idle MXU against a resident ones vector; kept exact/XLU here so the
    # 1e-5 normalization check holds.
    lane = jax.lax.broadcasted_iota(jnp.int32, hw.shape, 1)
    is_logit = lane < action_dim
    masked = jnp.where(is_logit, hw, -jnp.inf)
    m = jnp.max(masked, axis=-1, keepdims=True)
    e = jnp.exp(masked - m)                                          # 0 outside policy lanes
    denom = jnp.sum(e, axis=-1, keepdims=True)
    probs = e * pl.reciprocal(denom, approx=False)

    # Lane action_dim carries the raw value-head output; all other non-policy
    # lanes are exactly 0 (zero-padded weights/bias).  Single unmasked store.
    out_ref[...] = jnp.where(lane == action_dim, hw, probs).astype(out_ref.dtype)


def fuse_heads(w1, b1, wp, bp, wv, bv):
    """One-time parameter prep (call at init / whenever weights change):
    fuse policy + value heads into a zero-padded lane-dense slab and cast the
    MXU operands to bf16.  Keeps all of this off the per-step hot path."""
    H = w1.shape[1]
    A = wp.shape[1]
    assert A + 1 <= OUT_LANES
    w_heads = (jnp.zeros((H, OUT_LANES), jnp.float32)
               .at[:, :A].set(wp).at[:, A:A + 1].set(wv))
    b_heads = (jnp.zeros((1, OUT_LANES), jnp.float32)
               .at[:, :A].set(bp).at[:, A:A + 1].set(bv))
    fused = (w1.astype(jnp.bfloat16),
             b1.astype(jnp.float32),
             w_heads.astype(jnp.bfloat16),
             b_heads)
    return jax.tree_util.tree_map(jax.block_until_ready, fused)


@functools.partial(jax.jit, static_argnames=("action_dim", "tm", "out_dtype"))
def actor_critic_forward(state, w1_bf, b1, w_heads_bf, b_heads, *,
                         action_dim, tm=1024, out_dtype=jnp.float32):
    B, S = state.shape
    H = w1_bf.shape[1]
    A = action_dim
    assert A + 1 <= OUT_LANES
    assert w_heads_bf.shape == (H, OUT_LANES)

    # Batch tiling: TM rows per grid step, weights stay resident across steps.
    tm = _choose_tm(B, tm)
    b_pad = _round_up(B, tm)
    x = state
    if b_pad != B:
        x = jnp.pad(x, ((0, b_pad - B), (0, 0)))
    grid = (b_pad // tm,)

    flops = 2 * b_pad * (S * H + H * OUT_LANES)
    out_bytes = b_pad * OUT_LANES * jnp.dtype(out_dtype).itemsize
    bytes_accessed = (b_pad * S * 4 + w1_bf.size * 2 + w_heads_bf.size * 2
                      + b1.size * 4 + b_heads.size * 4 + out_bytes)

    out = pl.pallas_call(
        functools.partial(actor_critic_kernel, action_dim=A),
        out_shape=jax.ShapeDtypeStruct((b_pad, OUT_LANES), out_dtype),
        grid_spec=pltpu.PrefetchScalarGridSpec(
            num_scalar_prefetch=0,
            grid=grid,
            in_specs=[
                pl.BlockSpec((tm, S), lambda i: (i, 0)),          # state tile (pipelined)
                pl.BlockSpec((S, H), lambda i: (0, 0)),           # resident weights
                pl.BlockSpec((1, H), lambda i: (0, 0)),
                pl.BlockSpec((H, OUT_LANES), lambda i: (0, 0)),
                pl.BlockSpec((1, OUT_LANES), lambda i: (0, 0)),
            ],
            out_specs=pl.BlockSpec((tm, OUT_LANES), lambda i: (i, 0)),
        ),
        compiler_params=pltpu.CompilerParams(
            # Batch axis is embarrassingly parallel; on dual-TC chips (v7x) the
            # >=2-step grid lets both TensorCores take tiles.
            dimension_semantics=("parallel",),
        ),
        cost_estimate=pl.CostEstimate(
            flops=flops,
            transcendentals=b_pad * OUT_LANES,
            bytes_accessed=bytes_accessed,
        ),
    )(x, w1_bf, b1, w_heads_bf, b_heads)

    # Under jit these two slices fuse into a single pass over the slab.
    action_probs = out[:B, :A].astype(jnp.float32)
    state_value = out[:B, A:A + 1].astype(jnp.float32)
    return action_probs, state_value


def init_params(key, state_dim, action_dim, hidden=HIDDEN):
    # Deterministic synthetic init (uniform, roughly PyTorch Linear default scale).
    k1, k2, k3, k4, k5, k6 = jax.random.split(key, 6)

    def u(k, shape, fan_in):
        bound = 1.0 / jnp.sqrt(fan_in)
        return jax.random.uniform(k, shape, jnp.float32, -bound, bound)

    w1 = u(k1, (state_dim, hidden), state_dim)
    b1 = u(k2, (1, hidden), state_dim)
    wp = u(k3, (hidden, action_dim), hidden)
    bp = u(k4, (1, action_dim), hidden)
    wv = u(k5, (hidden, 1), hidden)
    bv = u(k6, (1, 1), hidden)
    return w1, b1, wp, bp, wv, bv


def reference_forward(state, w1, b1, wp, bp, wv, bv, *, emulate_bf16=False):
    if emulate_bf16:
        def dot(a, b):
            return jnp.dot(a.astype(jnp.bfloat16), b.astype(jnp.bfloat16),
                           preferred_element_type=jnp.float32)
    else:
        def dot(a, b):
            return jnp.dot(a, b, preferred_element_type=jnp.float32)
    h = jnp.maximum(dot(state, w1) + b1, 0.0)
    logits = dot(h, wp) + bp
    probs = jax.nn.softmax(logits, axis=-1)
    value = dot(h, wv) + bv
    return probs, value


if __name__ == "__main__":
    key = jax.random.PRNGKey(0)
    batch, state_dim, action_dim = 8, 16, 4

    pkey, skey = jax.random.split(key)
    params = init_params(pkey, state_dim, action_dim)
    state = jax.random.normal(skey, (batch, state_dim), jnp.float32)

    # One-time prep (hoisted out of the per-step hot path).
    fused = fuse_heads(*params)

    probs, value = actor_critic_forward(state, *fused, action_dim=action_dim)
    jax.block_until_ready((probs, value))

    assert probs.shape == (batch, action_dim)
    assert value.shape == (batch, 1)

    # Tight check vs a reference that applies the same bf16 MXU rounding.
    ref_probs_bf, ref_value_bf = reference_forward(state, *params, emulate_bf16=True)
    assert jnp.allclose(probs, ref_probs_bf, atol=1e-4, rtol=1e-4)
    assert jnp.allclose(value, ref_value_bf, atol=1e-4, rtol=1e-4)

    # Loose check vs the pure-f32 PyTorch-equivalent math (bf16 matmul error budget).
    ref_probs, ref_value = reference_forward(state, *params, emulate_bf16=False)
    assert jnp.allclose(probs, ref_probs, atol=3e-2, rtol=3e-2)
    assert jnp.allclose(value, ref_value, atol=3e-2, rtol=3e-2)

    assert jnp.allclose(jnp.sum(probs, axis=-1), 1.0, atol=1e-5)

    # Exercise the multi-tile grid + padding path (non-multiple batch).
    big_state = jax.random.normal(jax.random.PRNGKey(1), (300, state_dim), jnp.float32)
    big_probs, big_value = actor_critic_forward(big_state, *fused,
                                                action_dim=action_dim, tm=128)
    jax.block_until_ready((big_probs, big_value))
    ref_bp, ref_bv = reference_forward(big_state, *params, emulate_bf16=False)
    assert big_probs.shape == (300, action_dim) and big_value.shape == (300, 1)
    assert jnp.allclose(big_probs, ref_bp, atol=3e-2, rtol=3e-2)
    assert jnp.allclose(big_value, ref_bv, atol=3e-2, rtol=3e-2)

    # Default-tm path (tile-splitting for >=2 grid steps) on a larger batch.
    med_state = jax.random.normal(jax.random.PRNGKey(2), (600, state_dim), jnp.float32)
    med_probs, med_value = actor_critic_forward(med_state, *fused, action_dim=action_dim)
    jax.block_until_ready((med_probs, med_value))
    ref_mp, ref_mv = reference_forward(med_state, *params, emulate_bf16=False)
    assert jnp.allclose(med_probs, ref_mp, atol=3e-2, rtol=3e-2)
    assert jnp.allclose(med_value, ref_mv, atol=3e-2, rtol=3e-2)

    print("KERNEL_OK")
</pallas_src>

<mosaic_0001>
module attributes {stable_mosaic.version = 11 : i64} {
  func.func @actor_critic_kernel(%arg0: i32, %arg1: memref<16x16xf32, #tpu.memory_space<vmem>>, %arg2: memref<16x64xbf16, #tpu.memory_space<vmem>>, %arg3: memref<1x64xf32, #tpu.memory_space<vmem>>, %arg4: memref<64x128xbf16, #tpu.memory_space<vmem>>, %arg5: memref<1x128xf32, #tpu.memory_space<vmem>>, %arg6: memref<16x128xf32, #tpu.memory_space<vmem>>) attributes {dimension_semantics = [#tpu.dimension_semantics<parallel>], iteration_bounds = array<i64: 1>, scalar_prefetch = 0 : i64, scratch_operands = 0 : i64, tpu.core_type = #tpu.core_type<tc>, window_params = [{transform_indices = @transform_0, window_bounds = array<i64: 16, 16>}, {pipeline_mode = #tpu.pipeline_mode<synchronous>, transform_indices = @transform_1, window_bounds = array<i64: 16, 64>}, {pipeline_mode = #tpu.pipeline_mode<synchronous>, transform_indices = @transform_2, window_bounds = array<i64: 1, 64>}, {pipeline_mode = #tpu.pipeline_mode<synchronous>, transform_indices = @transform_3, window_bounds = array<i64: 64, 128>}, {pipeline_mode = #tpu.pipeline_mode<synchronous>, transform_indices = @transform_4, window_bounds = array<i64: 1, 128>}, {transform_indices = @transform_5, window_bounds = array<i64: 16, 128>}]} {
    %c0 = arith.constant 0 : index
    %c0_0 = arith.constant 0 : index
    %0 = vector.load %arg1[%c0, %c0_0] : memref<16x16xf32, #tpu.memory_space<vmem>>, vector<16x16xf32>
    %1 = arith.truncf %0 : vector<16x16xf32> to vector<16x16xbf16>
    %c0_1 = arith.constant 0 : index
    %c0_2 = arith.constant 0 : index
    %2 = vector.load %arg2[%c0_1, %c0_2] : memref<16x64xbf16, #tpu.memory_space<vmem>>, vector<16x64xbf16>
    %cst = arith.constant dense<0.000000e+00> : vector<16x64xf32>
    %3 = tpu.matmul %1, %2, %cst {dimension_numbers = #tpu.dot_dimension_numbers<[1], [0], [0], [1], [0, 0, 1, 1], [], []>} : vector<16x16xbf16>, vector<16x64xbf16>, vector<16x64xf32> -> vector<16x64xf32>
    %c0_3 = arith.constant 0 : index
    %c0_4 = arith.constant 0 : index
    %4 = vector.load %arg3[%c0_3, %c0_4] : memref<1x64xf32, #tpu.memory_space<vmem>>, vector<1x64xf32>
    %5 = vector.broadcast %4 : vector<1x64xf32> to vector<16x64xf32>
    %6 = arith.addf %3, %5 : vector<16x64xf32>
    %cst_5 = arith.constant 0.000000e+00 : f32
    %7 = vector.broadcast %cst_5 : f32 to vector<16x64xf32>
    %8 = arith.maximumf %6, %7 : vector<16x64xf32>
    %9 = arith.truncf %8 : vector<16x64xf32> to vector<16x64xbf16>
    %c0_6 = arith.constant 0 : index
    %c0_7 = arith.constant 0 : index
    %10 = vector.load %arg4[%c0_6, %c0_7] : memref<64x128xbf16, #tpu.memory_space<vmem>>, vector<64x128xbf16>
    %cst_8 = arith.constant dense<0.000000e+00> : vector<16x128xf32>
    %11 = tpu.matmul %9, %10, %cst_8 {dimension_numbers = #tpu.dot_dimension_numbers<[1], [0], [0], [1], [0, 0, 1, 1], [], []>} : vector<16x64xbf16>, vector<64x128xbf16>, vector<16x128xf32> -> vector<16x128xf32>
    %c0_9 = arith.constant 0 : index
    %c0_10 = arith.constant 0 : index
    %12 = vector.load %arg5[%c0_9, %c0_10] : memref<1x128xf32, #tpu.memory_space<vmem>>, vector<1x128xf32>
    %13 = vector.broadcast %12 : vector<1x128xf32> to vector<16x128xf32>
    %14 = arith.addf %11, %13 : vector<16x128xf32>
    %15 = tpu.iota {dimensions = array<i32: 1>} : vector<16x128xi32>
    %c4_i32 = arith.constant 4 : i32
    %16 = vector.broadcast %c4_i32 : i32 to vector<16x128xi32>
    %17 = arith.cmpi slt, %15, %16 : vector<16x128xi32>
    %cst_11 = arith.constant 0xFF800000 : f32
    %18 = vector.broadcast %cst_11 : f32 to vector<16x128xf32>
    %19 = arith.select %17, %14, %18 : vector<16x128xi1>, vector<16x128xf32>
    %cst_12 = arith.constant dense<0xFF800000> : vector<16xf32>
    %20 = vector.multi_reduction <maximumf>, %19, %cst_12 [1] : vector<16x128xf32> to vector<16xf32>
    %21 = vector.shape_cast %20 : vector<16xf32> to vector<16x1xf32>
    %22 = vector.broadcast %21 : vector<16x1xf32> to vector<16x128xf32>
    %23 = arith.subf %19, %22 : vector<16x128xf32>
    %24 = math.exp %23 : vector<16x128xf32>
    %cst_13 = arith.constant dense<0.000000e+00> : vector<16xf32>
    %25 = vector.multi_reduction <add>, %24, %cst_13 [1] : vector<16x128xf32> to vector<16xf32>
    %26 = vector.shape_cast %25 : vector<16xf32> to vector<16x1xf32>
    %27 = tpu.reciprocal %26 : vector<16x1xf32> -> vector<16x1xf32>
    %28 = vector.broadcast %27 : vector<16x1xf32> to vector<16x128xf32>
    %29 = arith.mulf %24, %28 : vector<16x128xf32>
    %c4_i32_14 = arith.constant 4 : i32
    %30 = vector.broadcast %c4_i32_14 : i32 to vector<16x128xi32>
    %31 = arith.cmpi eq, %15, %30 : vector<16x128xi32>
    %32 = arith.select %31, %14, %29 : vector<16x128xi1>, vector<16x128xf32>
    %c0_15 = arith.constant 0 : index
    %c0_16 = arith.constant 0 : index
    %33 = vector.load %arg6[%c0_15, %c0_16] : memref<16x128xf32, #tpu.memory_space<vmem>>, vector<16x128xf32>
    tpu.vector_store %arg6[%c0_15, %c0_16], %32 {strides = array<i32>} : memref<16x128xf32, #tpu.memory_space<vmem>>, vector<16x128xf32>,
    return
  }
  func.func @transform_0(%arg0: i32) -> (i32, i32) {
    %c0_i32 = arith.constant 0 : i32
    %c0_i32_0 = arith.constant 0 : i32
    return %arg0, %c0_i32 : i32, i32
  }
  func.func @transform_1(%arg0: i32) -> (i32, i32) {
    %c0_i32 = arith.constant 0 : i32
    %c0_i32_0 = arith.constant 0 : i32
    %c0_i32_1 = arith.constant 0 : i32
    return %c0_i32, %c0_i32_0 : i32, i32
  }
  func.func @transform_2(%arg0: i32) -> (i32, i32) {
    %c0_i32 = arith.constant 0 : i32
    %c0_i32_0 = arith.constant 0 : i32
    %c0_i32_1 = arith.constant 0 : i32
    return %c0_i32, %c0_i32_0 : i32, i32
  }
  func.func @transform_3(%arg0: i32) -> (i32, i32) {
    %c0_i32 = arith.constant 0 : i32
    %c0_i32_0 = arith.constant 0 : i32
    %c0_i32_1 = arith.constant 0 : i32
    return %c0_i32, %c0_i32_0 : i32, i32
  }
  func.func @transform_4(%arg0: i32) -> (i32, i32) {
    %c0_i32 = arith.constant 0 : i32
    %c0_i32_0 = arith.constant 0 : i32
    %c0_i32_1 = arith.constant 0 : i32
    return %c0_i32, %c0_i32_0 : i32, i32
  }
  func.func @transform_5(%arg0: i32) -> (i32, i32) {
    %c0_i32 = arith.constant 0 : i32
    %c0_i32_0 = arith.constant 0 : i32
    return %arg0, %c0_i32 : i32, i32
  }
}

</mosaic_0001>

<llo_original>
// kernel: actor_critic_forward.1
$region0: #{actor_critic_forward.1}
  #allocation0 [shape = 'u32[]', space=smem, size = 0x4, offset = 0x4, fixed_abs, tag = 'smem constant byte address 0x4 - core index']
  #allocation1 [shape = 'u32[144,128]{1,0:T(1,128)}', space=vmem, size = 0x12000, scoped, tag = 'internal scratch']
  %s0 = inlined_call_operand.vmem [shape: f32[16,16], index: 0, kind: input, shape index: {}]
  %s1 = inlined_call_operand.vmem [shape: bf16[16,64], index: 1, kind: input, shape index: {}]
  %s2 = inlined_call_operand.vmem [shape: f32[1,64], index: 2, kind: input, shape index: {}]
  %s3 = inlined_call_operand.hbm [shape: bf16[64,128], index: 3, kind: input, shape index: {}]
  %s4 = inlined_call_operand.vmem [shape: f32[1,128], index: 4, kind: input, shape index: {}]
  %s5 = inlined_call_operand.vmem [shape: f32[16,128], index: 5, kind: output, shape index: {}]
  %s6 = sld [smem:[#allocation0]]
  $region34: #{actor_critic_forward.1} parent=0
    _
  %s8 = ssub.s32 1, %s6
  %s9 = scalar_select 0, %s8, %s6
  $region1: #{actor_critic_forward.1} parent=0
    #allocation2 [shape = 'u8[16384]{0}', space=vmem, size = 0x4000, scoped, tag = 'input window, operand 3, single buffered']
    #allocation3 [shape = 's32[1]{0}', space=sflag, size = 0x4, scoped, tag = 'scoped memory for actor_critic_forward.1']
    %10 = vsyncpa [#allocation3], 0
    // Predicated region
    $region2: #{actor_critic_forward.1} parent=1 // pred_check
      _
    $region3: #{actor_critic_forward.1} parent=1 // pred_check_branch
      %12 = sbr.rel (0) target = $region5
    $region4: #{actor_critic_forward.1} parent=1 // pred_region
      _
    $region5: #{actor_critic_forward.1} parent=1 // pred_fallthru
      _
    // Predicated region
    $region6: #{actor_critic_forward.1} parent=1 // pred_check
      _
    $region7: #{actor_critic_forward.1} parent=1 // pred_check_branch
      %14 = sbr.rel (0) target = $region9
    $region8: #{actor_critic_forward.1} parent=1 // pred_region
      _
    $region9: #{actor_critic_forward.1} parent=1 // pred_fallthru
      _
    // Predicated region
    $region10: #{actor_critic_forward.1} parent=1 // pred_check
      _
    $region11: #{actor_critic_forward.1} parent=1 // pred_check_branch
      %16 = sbr.rel (0) target = $region13
    $region12: #{actor_critic_forward.1} parent=1 // pred_region
      _
    $region13: #{actor_critic_forward.1} parent=1 // pred_fallthru
      _
    // Predicated region
    $region14: #{actor_critic_forward.1} parent=1 // pred_check
      _
    $region15: #{actor_critic_forward.1} parent=1 // pred_check_branch
      %18 = sbr.rel (0) target = $region17
    $region16: #{actor_critic_forward.1} parent=1 // pred_region
      %s20 = ssub.s32 512, 512
      %21 = vsyncadd [#allocation3], %s20
      %s22 = sshll.u32 [#allocation2], 4
      %s23 = int_to_ptr.vmem [resolvable:$true] %s22
      %28 = dma.hbm_to_vmem [thread:$0]  %s3, 512, %s23, [#allocation3], 64, 64, 4
    $region17: #{actor_critic_forward.1} parent=1 // pred_fallthru
      _
    // Predicated region
    $region18: #{actor_critic_forward.1} parent=1 // pred_check
      _
    $region19: #{actor_critic_forward.1} parent=1 // pred_check_branch
      %30 = sbr.rel (0) target = $region21
    $region20: #{actor_critic_forward.1} parent=1 // pred_region
      _
    $region21: #{actor_critic_forward.1} parent=1 // pred_fallthru
      _
    // Predicated region
    $region22: #{actor_critic_forward.1} parent=1 // pred_check
      _
    $region23: #{actor_critic_forward.1} parent=1 // pred_check_branch
      %32 = sbr.rel (0) target = $region25
    $region24: #{actor_critic_forward.1} parent=1 // pred_region
      %33 = dma.done [#allocation3], 512
    $region25: #{actor_critic_forward.1} parent=1 // pred_fallthru
      _
    %v35 = vld [vmem:[%s0] sm:$0xff]
    %v36 = vld [vmem:[%s0 + $0x8] sm:$0xff]
    %v37 = vpack.c.bf16 %v36, %v35
    %v38 = vld [vmem:[%s1] sm:$0xf]
    %v39 = vld [vmem:[%s1 + $0x4] sm:$0xf]
    %v40 = vld [vmem:[%s2] sm:$0x1]
    %v42 = vlaneseq
    %v43 = vshrl.u32 %v42, 7
    %v44 = vsub.s32 0, %v43
    %v45 = vrot.slane %v40, %v44
    %v49 = vunpack.c.l.b16 %v38
    %v50 = vunpack.c.l.b16 %v39
    %v51 = vpack.c.b16 %v50, %v49
    %vm53 = vcmask 130048
    %v55 = vsel %vm53, %v37, 0
    %57 = vmatprep.subr.bf16.mxu0 0
    %58 = vmatpush1.bf16.msra.mxu0 0
    %59 = vmatprep.subr.bf16.mxu0 0
    %60 = vmatpush1.bf16.msra.mxu0 0
    %61 = vmatprep.subr.bf16.mxu0 0
    %62 = vmatpush1.bf16.msra.mxu0 0
    %63 = vmatprep.subr.bf16.mxu0 0
    %64 = vmatpush1.bf16.msra.mxu0 0
    %65 = vmatprep.subr.bf16.mxu0 0
    %66 = vmatpush1.bf16.msra.mxu0 0
    %67 = vmatprep.subr.bf16.mxu0 0
    %68 = vmatpush1.bf16.msra.mxu0 0
    %69 = vmatprep.subr.bf16.mxu0 0
    %70 = vmatpush1.bf16.msra.mxu0 0
    %71 = vmatprep.subr.bf16.mxu0 0
    %72 = vmatpush1.bf16.msra.mxu0 %v51
    %73 = vmatprep.subr.bf16.mxu0 0
    %74 = vmatpush2.bf16.msra.mxu0 0
    %75 = vmatprep.subr.bf16.mxu0 0
    %76 = vmatpush2.bf16.msra.mxu0 0
    %77 = vmatprep.subr.bf16.mxu0 0
    %78 = vmatpush2.bf16.msra.mxu0 0
    %79 = vmatprep.subr.bf16.mxu0 0
    %80 = vmatpush2.bf16.msra.mxu0 0
    %81 = vmatprep.subr.bf16.mxu0 0
    %82 = vmatpush2.bf16.msra.mxu0 0
    %83 = vmatprep.subr.bf16.mxu0 0
    %84 = vmatpush2.bf16.msra.mxu0 0
    %85 = vmatprep.subr.bf16.mxu0 0
    %86 = vmatpush2.bf16.msra.mxu0 0
    %87 = vmatprep.subr.bf16.mxu0 0
    %88 = vmatpush2.bf16.msra.mxu0 0
    %89 = vmatprep.mubr.bf16.mxu0 0
    %90 = vmatmul.mubr.bf16.gmra.mxu0 %v55
    %v91 = vpop.f32.mrf.mxu0
    %v92 = vadd.f32 %v45, %v91
    %v93 = vpop.f32.mrf.mxu0
    %v94 = vpop.f32.mrf.mxu0
    %v95 = vadd.f32 %v45, %v94
    %v96 = vpop.f32.mrf.mxu0
    %97 = vdwg.mxu0
    %v98 = vmax.f32 %v92, 0.0
    %v99 = vmax.f32 %v95, 0.0
    %v100 = vpack.c.bf16 %v99, %v98
    %v101 = vld [vmem:[#allocation2] sm:$0xf]
    %v102 = vld [vmem:[#allocation2 + $0x4] sm:$0xf]
    %v103 = vld [vmem:[#allocation2 + $0x8] sm:$0xf]
    %v104 = vld [vmem:[#allocation2 + $0xc] sm:$0xf]
    %v105 = vld [vmem:[#allocation2 + $0x10] sm:$0xf]
    %v106 = vld [vmem:[#allocation2 + $0x14] sm:$0xf]
    %v107 = vld [vmem:[#allocation2 + $0x18] sm:$0xf]
    %v108 = vld [vmem:[#allocation2 + $0x1c] sm:$0xf]
    %v109 = vld [vmem:[%s4] sm:$0x1]
    %v111 = vlaneseq
    %v112 = vshrl.u32 %v111, 7
    %v113 = vsub.s32 0, %v112
    %v114 = vrot.slane %v109, %v113
    %v124 = vunpack.c.l.b16 %v101
    %v125 = vunpack.c.l.b16 %v102
    %v126 = vunpack.c.l.b16 %v103
    %v127 = vunpack.c.l.b16 %v104
    %v128 = vunpack.c.l.b16 %v105
    %v129 = vunpack.c.l.b16 %v106
    %v130 = vunpack.c.l.b16 %v107
    %v131 = vunpack.c.l.b16 %v108
    %v132 = vpack.c.b16 %v125, %v124
    %v133 = vpack.c.b16 %v127, %v126
    %v134 = vpack.c.b16 %v129, %v128
    %v135 = vpack.c.b16 %v131, %v130
    %vm140 = vcmask 523264
    %v142 = vsel %vm140, %v100, 0
    %144 = vmatprep.subr.bf16.mxu0 0
    %145 = vmatpush1.bf16.msra.mxu0 0
    %146 = vmatprep.subr.bf16.mxu0 0
    %147 = vmatpush1.bf16.msra.mxu0 0
    %148 = vmatprep.subr.bf16.mxu0 0
    %149 = vmatpush1.bf16.msra.mxu0 0
    %150 = vmatprep.subr.bf16.mxu0 0
    %151 = vmatpush1.bf16.msra.mxu0 0
    %152 = vmatprep.subr.bf16.mxu0 0
    %153 = vmatpush1.bf16.msra.mxu0 %v135
    %154 = vmatprep.subr.bf16.mxu0 0
    %155 = vmatpush1.bf16.msra.mxu0 %v134
    %156 = vmatprep.subr.bf16.mxu0 0
    %157 = vmatpush1.bf16.msra.mxu0 %v133
    %158 = vmatprep.subr.bf16.mxu0 0
    %159 = vmatpush1.bf16.msra.mxu0 %v132
    %160 = vmatprep.subr.bf16.mxu0 0
    %161 = vmatpush2.bf16.msra.mxu0 0
    %162 = vmatprep.subr.bf16.mxu0 0
    %163 = vmatpush2.bf16.msra.mxu0 0
    %164 = vmatprep.subr.bf16.mxu0 0
    %165 = vmatpush2.bf16.msra.mxu0 0
    %166 = vmatprep.subr.bf16.mxu0 0
    %167 = vmatpush2.bf16.msra.mxu0 0
    %168 = vmatprep.subr.bf16.mxu0 0
    %169 = vmatpush2.bf16.msra.mxu0 0
    %170 = vmatprep.subr.bf16.mxu0 0
    %171 = vmatpush2.bf16.msra.mxu0 0
    %172 = vmatprep.subr.bf16.mxu0 0
    %173 = vmatpush2.bf16.msra.mxu0 0
    %174 = vmatprep.subr.bf16.mxu0 0
    %175 = vmatpush2.bf16.msra.mxu0 0
    %176 = vmatprep.mubr.bf16.mxu0 0
    %177 = vmatmul.mubr.bf16.gmra.mxu0 %v142
    %v178 = vpop.f32.mrf.mxu0
    %v179 = vadd.f32 %v114, %v178
    %v180 = vpop.f32.mrf.mxu0
    %v181 = vpop.f32.mrf.mxu0
    %v182 = vadd.f32 %v114, %v181
    %v183 = vpop.f32.mrf.mxu0
    %184 = vdwg.mxu0
    %v185 = vlaneseq
    %v186 = vand.u32 %v185, 127
    %vm187 = vcmp.lt.s32.totalorder %v186, 4
    %v188 = vsel %vm187, %v179, -inf
    %v189 = vsel %vm187, %v182, -inf
    %190 = vmax.xlane.f32.xlu0 %v188
    %v191 = vpop.xlane.xlu0 %190
    %192 = vmax.xlane.f32.xlu0 %v189
    %v193 = vpop.xlane.xlu0 %192
    %v194 = vsub.f32 %v188, %v191
    %v195 = vsub.f32 %v189, %v193
    %v196 = vmul.f32 %v194, 1.442695
    %v197 = vpow.pop %v196
    %v198 = vmul.f32 %v195, 1.442695
    %v199 = vpow.pop %v198
    %200 = vadd.xlane.f32.xlu0 %v197
    %v201 = vpop.xlane.xlu0 %200
    %202 = vadd.xlane.f32.xlu0 %v199
    %v203 = vpop.xlane.xlu0 %202
    %v204 = vrcp.pop %v201
    %v205 = vrcp.pop %v203
    %v206 = vmul.f32 %v197, %v204
    %v207 = vmul.f32 %v199, %v205
    %vm208 = vcmp.eq.s32.totalorder %v186, 4
    %v209 = vsel %vm208, %v179, %v206
    %v210 = vsel %vm208, %v182, %v207
    %211 = vst [vmem:[%s5] sm:$0xff] %v209
    %212 = vst [vmem:[%s5 + $0x8] sm:$0xff] %v210
    // Predicated region
    $region26: #{actor_critic_forward.1} parent=1 // pred_check
      _
    $region27: #{actor_critic_forward.1} parent=1 // pred_check_branch
      %214 = sbr.rel (0) target = $region29
    $region28: #{actor_critic_forward.1} parent=1 // pred_region
      _
    $region29: #{actor_critic_forward.1} parent=1 // pred_fallthru
      _
    // Predicated region
    $region30: #{actor_critic_forward.1} parent=1 // pred_check
      _
    $region31: #{actor_critic_forward.1} parent=1 // pred_check_branch
      %216 = sbr.rel (0) target = $region33
    $region32: #{actor_critic_forward.1} parent=1 // pred_region
      _
    $region33: #{actor_critic_forward.1} parent=1 // pred_fallthru
      _
    %217 = vsyncpa [#allocation3], 1

</llo_original>
